<compile_context>
chip_gen: v5e
topology: v5e:2x2
jax: 0.10.0
libtpu: 0.0.40
codegen_flags: <defaults>
</compile_context>

<pallas_src>
import jax
import jax.numpy as jnp
from jax.experimental import pallas as pl
from jax.experimental.pallas import tpu as pltpu

SIG_SHOT_MIN, SIG_SHOT_MAX = 0.0001, 0.01
SIG_READ_MIN, SIG_READ_MAX = 0.001, 0.03
SIG_SHOT = (SIG_SHOT_MAX - SIG_SHOT_MIN) / 2.0   # test=True branch of add_noise
SIG_READ = (SIG_READ_MAX - SIG_READ_MIN) / 2.0


def _quad_kernel(shutter_ref, video_ref, n_shot_ref, n_read_ref, out_ref):
    # shutter_ref: (T, SUB, 128) f32   video_ref: (1, T, SUB, 128) bf16/f32
    # n_shot_ref / n_read_ref / out_ref: (1, SUB, 128) f32
    t_frames = shutter_ref.shape[0]

    # Unrolled temporal accumulation in f32; (T, SUB, 128) product never materialized.
    acc = shutter_ref[0] * video_ref[0, 0].astype(jnp.float32)
    for t in range(1, t_frames):
        acc = acc + shutter_ref[t] * video_ref[0, t].astype(jnp.float32)

    # (meas / num_frames) * (num_frames / 8) == meas / 8 exactly (nf is a power of two).
    img = acc * 0.125

    shot = jnp.sqrt(jnp.maximum(img, 0.0)) * SIG_SHOT * n_shot_ref[0]
    read = SIG_READ * n_read_ref[0]
    out_ref[0] = jnp.clip(img + shot + read, 0.0, 1.0)


def _pick_row_tile(rows, t_frames, vid_bytes, budget_bytes=6 << 20):
    """Largest multiple-of-8 row tile dividing `rows` that keeps the double-buffered
    working set (video + shutter + noise + out) under ~budget_bytes."""
    per_row = 128 * (2 * t_frames * vid_bytes + 2 * t_frames * 4 + 6 * 4)
    max_rows = max(8, budget_bytes // per_row)
    if rows <= max_rows:
        return rows
    cap = (max_rows // 8) * 8
    for cand in range(cap, 7, -8):
        if rows % cand == 0:
            return cand
    # TODO(synk): no multiple-of-8 divisor fits the budget; fall back to full rows.
    return rows


def quad_forward(video_block, shutter, noise_shot, noise_read):
    """video_block: (B, T, H, W) any float dtype (bf16 recommended, upcast in-kernel),
    shutter: (T, H, W), noise_*: (B, 1, H, W). Returns (B, 1, H, W) f32."""
    B, T, H, W = video_block.shape
    assert shutter.shape == (T, H, W)
    HW = H * W
    hw_pad = ((HW + 127) // 128) * 128
    R = hw_pad // 128  # lane-dense rows of 128 pixels

    def _to_lanes(x_flat):  # (..., HW) -> (..., R, 128), zero-padded if needed
        if hw_pad != HW:
            pad = [(0, 0)] * (x_flat.ndim - 1) + [(0, hw_pad - HW)]
            x_flat = jnp.pad(x_flat, pad)
        return x_flat.reshape(x_flat.shape[:-1] + (R, 128))

    vid = _to_lanes(video_block.reshape(B, T, HW))
    sh = _to_lanes(shutter.reshape(T, HW).astype(jnp.float32))
    ns = _to_lanes(noise_shot.reshape(B, HW).astype(jnp.float32))
    nr = _to_lanes(noise_read.reshape(B, HW).astype(jnp.float32))

    vid_bytes = jnp.dtype(vid.dtype).itemsize
    sub = _pick_row_tile(R, T, vid_bytes)
    n_tiles = R // sub

    out_flat = pl.pallas_call(
        _quad_kernel,
        out_shape=jax.ShapeDtypeStruct((B, R, 128), jnp.float32),
        grid_spec=pltpu.PrefetchScalarGridSpec(
            num_scalar_prefetch=0,
            grid=(n_tiles, B),  # batch innermost -> shutter tile reused across B (no re-DMA)
            in_specs=[
                pl.BlockSpec((T, sub, 128), lambda ti, b: (0, ti, 0)),        # shutter (shared)
                pl.BlockSpec((1, T, sub, 128), lambda ti, b: (b, 0, ti, 0)),  # video
                pl.BlockSpec((1, sub, 128), lambda ti, b: (b, ti, 0)),        # shot noise
                pl.BlockSpec((1, sub, 128), lambda ti, b: (b, ti, 0)),        # read noise
            ],
            out_specs=pl.BlockSpec((1, sub, 128), lambda ti, b: (b, ti, 0)),
        ),
        compiler_params=pltpu.CompilerParams(
            dimension_semantics=("parallel", "parallel")),
    )(sh, vid, ns, nr)

    return out_flat.reshape(B, hw_pad)[:, :HW].reshape(B, 1, H, W)


def make_quad_params(block_size):
    """Deterministically build the Quad shutter mask and per-pixel frame counts."""
    T, H, W = block_size
    yy, xx = jnp.meshgrid(jnp.arange(H), jnp.arange(W), indexing="ij")
    ee = (yy % 2 == 0) & (xx % 2 == 0)   # 8-frame pixels
    oe = (yy % 2 == 1) & (xx % 2 == 0)   # 4-frame pixels
    eo = (yy % 2 == 0) & (xx % 2 == 1)   # 4-frame pixels
    oo = (yy % 2 == 1) & (xx % 2 == 1)   # 1-frame pixels

    t = jnp.arange(T)[:, None, None]
    shutter = (
        (ee[None] & (t < 8)) | ((oe[None] | eo[None]) & (t < 4)) | (oo[None] & (t < 1))
    ).astype(jnp.float32)                                                    # (T, H, W)

    num_frames = jnp.where(ee, 8.0, jnp.where(oe | eo, 4.0, 1.0)).astype(jnp.float32)  # (H, W)
    return shutter, num_frames


if __name__ == "__main__":
    B, T, H, W = 2, 8, 16, 16
    key = jax.random.PRNGKey(0)
    k_vid, k_shot, k_read = jax.random.split(key, 3)

    # Non-negative video block (normalized frames); pass it in bf16 to halve HBM traffic.
    video_f32 = jax.random.uniform(k_vid, (B, T, H, W), dtype=jnp.float32)
    video = video_f32.astype(jnp.bfloat16)
    noise_shot = jax.random.normal(k_shot, (B, 1, H, W), dtype=jnp.float32)
    noise_read = jax.random.normal(k_read, (B, 1, H, W), dtype=jnp.float32)

    shutter, num_frames = make_quad_params((T, H, W))

    out = quad_forward(video, shutter, noise_shot, noise_read)
    out = jax.block_until_ready(out)

    # Pure-JAX reference following the literal PyTorch op order (div by nf, then * nf/8),
    # fed the same bf16-rounded video the kernel consumes.
    v_ref = video.astype(jnp.float32)
    meas_ref = jnp.sum(shutter[None] * v_ref, axis=1, keepdims=True)
    meas_ref = meas_ref / num_frames[None, None]
    img_ref = meas_ref * (num_frames[None, None] / 8.0)
    ref = jnp.clip(
        img_ref + jnp.sqrt(img_ref) * SIG_SHOT * noise_shot + SIG_READ * noise_read, 0.0, 1.0
    )

    assert out.shape == (B, 1, H, W)
    assert jnp.allclose(out, ref, atol=1e-5, rtol=1e-5)

    print("KERNEL_OK")
</pallas_src>

<mosaic_0001>
module attributes {stable_mosaic.version = 11 : i64} {
  func.func @_quad_kernel(%arg0: i32, %arg1: i32, %arg2: memref<8x2x128xf32, #tpu.memory_space<vmem>>, %arg3: memref<1x8x2x128xbf16, #tpu.memory_space<vmem>>, %arg4: memref<1x2x128xf32, #tpu.memory_space<vmem>>, %arg5: memref<1x2x128xf32, #tpu.memory_space<vmem>>, %arg6: memref<1x2x128xf32, #tpu.memory_space<vmem>>) attributes {dimension_semantics = [#tpu.dimension_semantics<parallel>, #tpu.dimension_semantics<parallel>], iteration_bounds = array<i64: 1, 2>, scalar_prefetch = 0 : i64, scratch_operands = 0 : i64, tpu.core_type = #tpu.core_type<tc>, window_params = [{transform_indices = @transform_0, window_bounds = array<i64: 8, 2, 128>}, {transform_indices = @transform_1, window_bounds = array<i64: 1, 8, 2, 128>}, {transform_indices = @transform_2, window_bounds = array<i64: 1, 2, 128>}, {transform_indices = @transform_3, window_bounds = array<i64: 1, 2, 128>}, {transform_indices = @transform_4, window_bounds = array<i64: 1, 2, 128>}]} {
    %c0 = arith.constant 0 : index
    %c0_0 = arith.constant 0 : index
    %c0_1 = arith.constant 0 : index
    %0 = vector.load %arg2[%c0, %c0_0, %c0_1] : memref<8x2x128xf32, #tpu.memory_space<vmem>>, vector<1x2x128xf32>
    %1 = vector.shape_cast %0 : vector<1x2x128xf32> to vector<2x128xf32>
    %c0_2 = arith.constant 0 : index
    %c0_3 = arith.constant 0 : index
    %c0_4 = arith.constant 0 : index
    %c0_5 = arith.constant 0 : index
    %2 = vector.load %arg3[%c0_2, %c0_3, %c0_4, %c0_5] : memref<1x8x2x128xbf16, #tpu.memory_space<vmem>>, vector<1x1x2x128xbf16>
    %3 = vector.shape_cast %2 : vector<1x1x2x128xbf16> to vector<2x128xbf16>
    %4 = arith.extf %3 : vector<2x128xbf16> to vector<2x128xf32>
    %5 = arith.mulf %1, %4 : vector<2x128xf32>
    %c1 = arith.constant 1 : index
    %c0_6 = arith.constant 0 : index
    %c0_7 = arith.constant 0 : index
    %6 = vector.load %arg2[%c1, %c0_6, %c0_7] : memref<8x2x128xf32, #tpu.memory_space<vmem>>, vector<1x2x128xf32>
    %7 = vector.shape_cast %6 : vector<1x2x128xf32> to vector<2x128xf32>
    %c0_8 = arith.constant 0 : index
    %c1_9 = arith.constant 1 : index
    %c0_10 = arith.constant 0 : index
    %c0_11 = arith.constant 0 : index
    %8 = vector.load %arg3[%c0_8, %c1_9, %c0_10, %c0_11] : memref<1x8x2x128xbf16, #tpu.memory_space<vmem>>, vector<1x1x2x128xbf16>
    %9 = vector.shape_cast %8 : vector<1x1x2x128xbf16> to vector<2x128xbf16>
    %10 = arith.extf %9 : vector<2x128xbf16> to vector<2x128xf32>
    %11 = arith.mulf %7, %10 : vector<2x128xf32>
    %12 = arith.addf %5, %11 : vector<2x128xf32>
    %c2 = arith.constant 2 : index
    %c0_12 = arith.constant 0 : index
    %c0_13 = arith.constant 0 : index
    %13 = vector.load %arg2[%c2, %c0_12, %c0_13] : memref<8x2x128xf32, #tpu.memory_space<vmem>>, vector<1x2x128xf32>
    %14 = vector.shape_cast %13 : vector<1x2x128xf32> to vector<2x128xf32>
    %c0_14 = arith.constant 0 : index
    %c2_15 = arith.constant 2 : index
    %c0_16 = arith.constant 0 : index
    %c0_17 = arith.constant 0 : index
    %15 = vector.load %arg3[%c0_14, %c2_15, %c0_16, %c0_17] : memref<1x8x2x128xbf16, #tpu.memory_space<vmem>>, vector<1x1x2x128xbf16>
    %16 = vector.shape_cast %15 : vector<1x1x2x128xbf16> to vector<2x128xbf16>
    %17 = arith.extf %16 : vector<2x128xbf16> to vector<2x128xf32>
    %18 = arith.mulf %14, %17 : vector<2x128xf32>
    %19 = arith.addf %12, %18 : vector<2x128xf32>
    %c3 = arith.constant 3 : index
    %c0_18 = arith.constant 0 : index
    %c0_19 = arith.constant 0 : index
    %20 = vector.load %arg2[%c3, %c0_18, %c0_19] : memref<8x2x128xf32, #tpu.memory_space<vmem>>, vector<1x2x128xf32>
    %21 = vector.shape_cast %20 : vector<1x2x128xf32> to vector<2x128xf32>
    %c0_20 = arith.constant 0 : index
    %c3_21 = arith.constant 3 : index
    %c0_22 = arith.constant 0 : index
    %c0_23 = arith.constant 0 : index
    %22 = vector.load %arg3[%c0_20, %c3_21, %c0_22, %c0_23] : memref<1x8x2x128xbf16, #tpu.memory_space<vmem>>, vector<1x1x2x128xbf16>
    %23 = vector.shape_cast %22 : vector<1x1x2x128xbf16> to vector<2x128xbf16>
    %24 = arith.extf %23 : vector<2x128xbf16> to vector<2x128xf32>
    %25 = arith.mulf %21, %24 : vector<2x128xf32>
    %26 = arith.addf %19, %25 : vector<2x128xf32>
    %c4 = arith.constant 4 : index
    %c0_24 = arith.constant 0 : index
    %c0_25 = arith.constant 0 : index
    %27 = vector.load %arg2[%c4, %c0_24, %c0_25] : memref<8x2x128xf32, #tpu.memory_space<vmem>>, vector<1x2x128xf32>
    %28 = vector.shape_cast %27 : vector<1x2x128xf32> to vector<2x128xf32>
    %c0_26 = arith.constant 0 : index
    %c4_27 = arith.constant 4 : index
    %c0_28 = arith.constant 0 : index
    %c0_29 = arith.constant 0 : index
    %29 = vector.load %arg3[%c0_26, %c4_27, %c0_28, %c0_29] : memref<1x8x2x128xbf16, #tpu.memory_space<vmem>>, vector<1x1x2x128xbf16>
    %30 = vector.shape_cast %29 : vector<1x1x2x128xbf16> to vector<2x128xbf16>
    %31 = arith.extf %30 : vector<2x128xbf16> to vector<2x128xf32>
    %32 = arith.mulf %28, %31 : vector<2x128xf32>
    %33 = arith.addf %26, %32 : vector<2x128xf32>
    %c5 = arith.constant 5 : index
    %c0_30 = arith.constant 0 : index
    %c0_31 = arith.constant 0 : index
    %34 = vector.load %arg2[%c5, %c0_30, %c0_31] : memref<8x2x128xf32, #tpu.memory_space<vmem>>, vector<1x2x128xf32>
    %35 = vector.shape_cast %34 : vector<1x2x128xf32> to vector<2x128xf32>
    %c0_32 = arith.constant 0 : index
    %c5_33 = arith.constant 5 : index
    %c0_34 = arith.constant 0 : index
    %c0_35 = arith.constant 0 : index
    %36 = vector.load %arg3[%c0_32, %c5_33, %c0_34, %c0_35] : memref<1x8x2x128xbf16, #tpu.memory_space<vmem>>, vector<1x1x2x128xbf16>
    %37 = vector.shape_cast %36 : vector<1x1x2x128xbf16> to vector<2x128xbf16>
    %38 = arith.extf %37 : vector<2x128xbf16> to vector<2x128xf32>
    %39 = arith.mulf %35, %38 : vector<2x128xf32>
    %40 = arith.addf %33, %39 : vector<2x128xf32>
    %c6 = arith.constant 6 : index
    %c0_36 = arith.constant 0 : index
    %c0_37 = arith.constant 0 : index
    %41 = vector.load %arg2[%c6, %c0_36, %c0_37] : memref<8x2x128xf32, #tpu.memory_space<vmem>>, vector<1x2x128xf32>
    %42 = vector.shape_cast %41 : vector<1x2x128xf32> to vector<2x128xf32>
    %c0_38 = arith.constant 0 : index
    %c6_39 = arith.constant 6 : index
    %c0_40 = arith.constant 0 : index
    %c0_41 = arith.constant 0 : index
    %43 = vector.load %arg3[%c0_38, %c6_39, %c0_40, %c0_41] : memref<1x8x2x128xbf16, #tpu.memory_space<vmem>>, vector<1x1x2x128xbf16>
    %44 = vector.shape_cast %43 : vector<1x1x2x128xbf16> to vector<2x128xbf16>
    %45 = arith.extf %44 : vector<2x128xbf16> to vector<2x128xf32>
    %46 = arith.mulf %42, %45 : vector<2x128xf32>
    %47 = arith.addf %40, %46 : vector<2x128xf32>
    %c7 = arith.constant 7 : index
    %c0_42 = arith.constant 0 : index
    %c0_43 = arith.constant 0 : index
    %48 = vector.load %arg2[%c7, %c0_42, %c0_43] : memref<8x2x128xf32, #tpu.memory_space<vmem>>, vector<1x2x128xf32>
    %49 = vector.shape_cast %48 : vector<1x2x128xf32> to vector<2x128xf32>
    %c0_44 = arith.constant 0 : index
    %c7_45 = arith.constant 7 : index
    %c0_46 = arith.constant 0 : index
    %c0_47 = arith.constant 0 : index
    %50 = vector.load %arg3[%c0_44, %c7_45, %c0_46, %c0_47] : memref<1x8x2x128xbf16, #tpu.memory_space<vmem>>, vector<1x1x2x128xbf16>
    %51 = vector.shape_cast %50 : vector<1x1x2x128xbf16> to vector<2x128xbf16>
    %52 = arith.extf %51 : vector<2x128xbf16> to vector<2x128xf32>
    %53 = arith.mulf %49, %52 : vector<2x128xf32>
    %54 = arith.addf %47, %53 : vector<2x128xf32>
    %cst = arith.constant 1.250000e-01 : f32
    %55 = vector.broadcast %cst : f32 to vector<2x128xf32>
    %56 = arith.mulf %54, %55 : vector<2x128xf32>
    %cst_48 = arith.constant 0.000000e+00 : f32
    %57 = vector.broadcast %cst_48 : f32 to vector<2x128xf32>
    %58 = arith.maximumf %56, %57 : vector<2x128xf32>
    %59 = math.sqrt %58 : vector<2x128xf32>
    %cst_49 = arith.constant 4.950000e-03 : f32
    %60 = vector.broadcast %cst_49 : f32 to vector<2x128xf32>
    %61 = arith.mulf %59, %60 : vector<2x128xf32>
    %c0_50 = arith.constant 0 : index
    %c0_51 = arith.constant 0 : index
    %c0_52 = arith.constant 0 : index
    %62 = vector.load %arg4[%c0_50, %c0_51, %c0_52] : memref<1x2x128xf32, #tpu.memory_space<vmem>>, vector<1x2x128xf32>
    %63 = vector.shape_cast %62 : vector<1x2x128xf32> to vector<2x128xf32>
    %64 = arith.mulf %61, %63 : vector<2x128xf32>
    %c0_53 = arith.constant 0 : index
    %c0_54 = arith.constant 0 : index
    %c0_55 = arith.constant 0 : index
    %65 = vector.load %arg5[%c0_53, %c0_54, %c0_55] : memref<1x2x128xf32, #tpu.memory_space<vmem>>, vector<1x2x128xf32>
    %66 = vector.shape_cast %65 : vector<1x2x128xf32> to vector<2x128xf32>
    %cst_56 = arith.constant 1.450000e-02 : f32
    %67 = vector.broadcast %cst_56 : f32 to vector<2x128xf32>
    %68 = arith.mulf %67, %66 : vector<2x128xf32>
    %69 = arith.addf %56, %64 : vector<2x128xf32>
    %70 = arith.addf %69, %68 : vector<2x128xf32>
    %cst_57 = arith.constant 0.000000e+00 : f32
    %cst_58 = arith.constant 1.000000e+00 : f32
    %71 = vector.broadcast %cst_57 : f32 to vector<2x128xf32>
    %72 = arith.maximumf %71, %70 : vector<2x128xf32>
    %73 = vector.broadcast %cst_58 : f32 to vector<2x128xf32>
    %74 = arith.minimumf %73, %72 : vector<2x128xf32>
    %c0_59 = arith.constant 0 : index
    %c0_60 = arith.constant 0 : index
    %c0_61 = arith.constant 0 : index
    %75 = vector.load %arg6[%c0_59, %c0_60, %c0_61] : memref<1x2x128xf32, #tpu.memory_space<vmem>>, vector<1x2x128xf32>
    %76 = vector.shape_cast %75 : vector<1x2x128xf32> to vector<2x128xf32>
    %77 = vector.shape_cast %74 : vector<2x128xf32> to vector<1x2x128xf32>
    tpu.vector_store %arg6[%c0_59, %c0_60, %c0_61], %77 {strides = array<i32>} : memref<1x2x128xf32, #tpu.memory_space<vmem>>, vector<1x2x128xf32>,
    return
  }
  func.func @transform_0(%arg0: i32, %arg1: i32) -> (i32, i32, i32) {
    %c0_i32 = arith.constant 0 : i32
    %c0_i32_0 = arith.constant 0 : i32
    %c0_i32_1 = arith.constant 0 : i32
    return %c0_i32, %arg0, %c0_i32_0 : i32, i32, i32
  }
  func.func @transform_1(%arg0: i32, %arg1: i32) -> (i32, i32, i32, i32) {
    %c0_i32 = arith.constant 0 : i32
    %c0_i32_0 = arith.constant 0 : i32
    %c0_i32_1 = arith.constant 0 : i32
    return %arg1, %c0_i32, %arg0, %c0_i32_0 : i32, i32, i32, i32
  }
  func.func @transform_2(%arg0: i32, %arg1: i32) -> (i32, i32, i32) {
    %c0_i32 = arith.constant 0 : i32
    %c0_i32_0 = arith.constant 0 : i32
    return %arg1, %arg0, %c0_i32 : i32, i32, i32
  }
  func.func @transform_3(%arg0: i32, %arg1: i32) -> (i32, i32, i32) {
    %c0_i32 = arith.constant 0 : i32
    %c0_i32_0 = arith.constant 0 : i32
    return %arg1, %arg0, %c0_i32 : i32, i32, i32
  }
  func.func @transform_4(%arg0: i32, %arg1: i32) -> (i32, i32, i32) {
    %c0_i32 = arith.constant 0 : i32
    %c0_i32_0 = arith.constant 0 : i32
    return %arg1, %arg0, %c0_i32 : i32, i32, i32
  }
}

</mosaic_0001>

<llo_original>
// kernel: tpu_custom_call.1
$region0: #{tpu_custom_call.1}
  #allocation0 [shape = 'u32[]', space=smem, size = 0x4, offset = 0x4, fixed_abs, tag = 'smem constant byte address 0x4 - core index']
  #allocation1 [shape = 'u32[72,128]{1,0:T(1,128)}', space=vmem, size = 0x9000, scoped, tag = 'internal scratch']
  %s0 = inlined_call_operand.hbm [shape: f32[8,2,128], index: 0, kind: input, shape index: {}]
  %s1 = inlined_call_operand.hbm [shape: bf16[2,8,2,128], index: 1, kind: input, shape index: {}]
  %s2 = inlined_call_operand.hbm [shape: f32[2,2,128], index: 2, kind: input, shape index: {}]
  %s3 = inlined_call_operand.hbm [shape: f32[2,2,128], index: 3, kind: input, shape index: {}]
  %s4 = inlined_call_operand.hbm [shape: f32[2,2,128], index: 4, kind: output, shape index: {}]
  %s5 = sld [smem:[#allocation0]]
  $region65: #{tpu_custom_call.1} parent=0
    _
  %s7 = ssub.s32 1, %s5
  %s8 = scalar_select 0, %s7, %s5
  $region1: #{tpu_custom_call.1} parent=0
    #allocation2 [shape = 'u8[8192]{0}', space=vmem, size = 0x2000, scoped, tag = 'input window, operand 0, single buffered']
    #allocation3 [shape = 's32[2]{0}', space=sflag, size = 0x8, scoped, tag = 'scoped memory for tpu_custom_call.1']
    #allocation4 [shape = 's32[2]{0}', space=sflag, size = 0x8, scoped, tag = 'scoped memory for tpu_custom_call.1']
    #allocation5 [shape = 'u8[8192]{0}', space=vmem, size = 0x2000, scoped, tag = 'input window, operand 1']
    #allocation6 [shape = 's32[2]{0}', space=sflag, size = 0x8, scoped, tag = 'scoped memory for tpu_custom_call.1']
    #allocation7 [shape = 'u8[2048]{0}', space=vmem, size = 0x800, scoped, tag = 'input window, operand 2']
    #allocation8 [shape = 'u8[2048]{0}', space=vmem, size = 0x800, scoped, tag = 'input window, operand 3']
    #allocation9 [shape = 's32[2]{0}', space=sflag, size = 0x8, scoped, tag = 'scoped memory for tpu_custom_call.1']
    #allocation10 [shape = 'u8[2048]{0}', space=vmem, size = 0x800, scoped, tag = 'output window, operand 0']
    %9 = vsyncpa [#allocation3], 0
    %10 = vsyncpa [#allocation6], 0
    %s11 = scalar_lea.sflag [#allocation6], 1
    %12 = vsyncpa %s11, 0
    %13 = vsyncpa [#allocation9], 0
    %s14 = scalar_lea.sflag [#allocation9], 1
    %15 = vsyncpa %s14, 0
    %16 = vsyncpa [#allocation4], 0
    %s17 = scalar_lea.sflag [#allocation4], 1
    %18 = vsyncpa %s17, 0
    loop: start=0, step=1, limit=4
    $region2: #{tpu_custom_call.1} parent=1 // loop_pre_header
      _
    $region3: #{tpu_custom_call.1} parent=1 // loop_header
      %s20 = sphi 0, %s24
      %p21 = scmp.ge.s32.totalorder %s20, 4
      %s27 = sphi 0, %s39
      %s28 = sphi 0, %s35
      %s29 = sphi 0, %s27
      %s30 = sphi 0, %s28
      %s31 = sphi 0, %s29
      %s32 = sphi 0, %s30
      %s42 = sphi 0, %s44
      %s45 = sphi 0, %s42
      %s46 = sphi 0, %s45
      %s62 = sphi 0, %s46
      %s70 = sphi 0, %s72
      %s73 = sphi 0, %s70
      %s74 = sphi 0, %s73
      %s90 = sphi 0, %s74
      %s98 = sphi 0, %s100
      %s101 = sphi 0, %s98
      %s102 = sphi 0, %s101
      %s118 = sphi 0, %s102
      %s126 = sphi 0, %s128
      %s129 = sphi 0, %s126
      %s130 = sphi 0, %s129
      %s146 = sphi 0, %s130
      %s154 = sphi 0, %s156
      %s157 = sphi 0, %s154
      %s158 = sphi 0, %s157
      %s174 = sphi 0, %s158
    $region4: #{tpu_custom_call.1} parent=1 // loop_header_branch
      %23 = sbr.rel (%p21) target = $region8
    $region5: #{tpu_custom_call.1} parent=1 // loop_body
      %s25 = ssub.s32 %s20, 1
      %s26 = ssub.s32 %s20, 2
      %s33 = sadd.s32 1, %s28
      %p34 = scmp.ge.s32.totalorder %s33, 2
      %s35 = scalar_select %p34, 0, %s33
      %s36 = sadd.s32 1, %s27
      %s37 = scalar_select %p34, %s36, %s27
      %p38 = scmp.ge.s32.totalorder %s37, 1
      %s39 = scalar_select %p38, 0, %s37
      %s40 = ssub.s32 %s27, %s39
      %p41 = scmp.eq.s32.totalorder %s40, 0
      %s43 = sadd.s32 %s42, 1
      %s44 = scalar_select %p41, %s42, %s43
      %p47 = pneg %p41
      %p48 = scmp.eq.s32.totalorder %s20, 1
      %p49 = por %p47, %p48
      %p50 = scmp.ne.s32.totalorder %s42, %s45
      %p51 = scmp.eq.s32.totalorder %s20, 0
      %p52 = por %p50, %p51
      %p53 = scmp.ne.s32.totalorder %s42, %s45
      %p54 = scmp.eq.s32.totalorder %s25, 1
      %p55 = por %p53, %p54
      %p56 = scmp.ne.s32.totalorder %s45, %s46
      %p57 = scmp.eq.s32.totalorder %s25, 0
      %p58 = por %p56, %p57
      %p59 = scmp.ne.s32.totalorder %s45, %s46
      %p60 = scmp.eq.s32.totalorder %s26, 1
      %p61 = por %p59, %p60
      %p63 = scmp.ne.s32.totalorder %s46, %s62
      %p64 = scmp.eq.s32.totalorder %s26, 0
      %p65 = por %p63, %p64
      %s66 = ssub.s32 %s28, %s35
      %s67 = ssub.s32 %s27, %s39
      %s68 = sor.u32 %s66, %s67
      %p69 = scmp.eq.s32.totalorder %s68, 0
      %s71 = sadd.s32 %s70, 1
      %s72 = scalar_select %p69, %s70, %s71
      %p75 = pneg %p69
      %p76 = scmp.eq.s32.totalorder %s20, 1
      %p77 = por %p75, %p76
      %p78 = scmp.ne.s32.totalorder %s70, %s73
      %p79 = scmp.eq.s32.totalorder %s20, 0
      %p80 = por %p78, %p79
      %p81 = scmp.ne.s32.totalorder %s70, %s73
      %p82 = scmp.eq.s32.totalorder %s25, 1
      %p83 = por %p81, %p82
      %p84 = scmp.ne.s32.totalorder %s73, %s74
      %p85 = scmp.eq.s32.totalorder %s25, 0
      %p86 = por %p84, %p85
      %p87 = scmp.ne.s32.totalorder %s73, %s74
      %p88 = scmp.eq.s32.totalorder %s26, 1
      %p89 = por %p87, %p88
      %p91 = scmp.ne.s32.totalorder %s74, %s90
      %p92 = scmp.eq.s32.totalorder %s26, 0
      %p93 = por %p91, %p92
      %s94 = ssub.s32 %s28, %s35
      %s95 = ssub.s32 %s27, %s39
      %s96 = sor.u32 %s94, %s95
      %p97 = scmp.eq.s32.totalorder %s96, 0
      %s99 = sadd.s32 %s98, 1
      %s100 = scalar_select %p97, %s98, %s99
      %p103 = pneg %p97
      %p104 = scmp.eq.s32.totalorder %s20, 1
      %p105 = por %p103, %p104
      %p106 = scmp.ne.s32.totalorder %s98, %s101
      %p107 = scmp.eq.s32.totalorder %s20, 0
      %p108 = por %p106, %p107
      %p109 = scmp.ne.s32.totalorder %s98, %s101
      %p110 = scmp.eq.s32.totalorder %s25, 1
      %p111 = por %p109, %p110
      %p112 = scmp.ne.s32.totalorder %s101, %s102
      %p113 = scmp.eq.s32.totalorder %s25, 0
      %p114 = por %p112, %p113
      %p115 = scmp.ne.s32.totalorder %s101, %s102
      %p116 = scmp.eq.s32.totalorder %s26, 1
      %p117 = por %p115, %p116
      %p119 = scmp.ne.s32.totalorder %s102, %s118
      %p120 = scmp.eq.s32.totalorder %s26, 0
      %p121 = por %p119, %p120
      %s122 = ssub.s32 %s28, %s35
      %s123 = ssub.s32 %s27, %s39
      %s124 = sor.u32 %s122, %s123
      %p125 = scmp.eq.s32.totalorder %s124, 0
      %s127 = sadd.s32 %s126, 1
      %s128 = scalar_select %p125, %s126, %s127
      %p131 = pneg %p125
      %p132 = scmp.eq.s32.totalorder %s20, 1
      %p133 = por %p131, %p132
      %p134 = scmp.ne.s32.totalorder %s126, %s129
      %p135 = scmp.eq.s32.totalorder %s20, 0
      %p136 = por %p134, %p135
      %p137 = scmp.ne.s32.totalorder %s126, %s129
      %p138 = scmp.eq.s32.totalorder %s25, 1
      %p139 = por %p137, %p138
      %p140 = scmp.ne.s32.totalorder %s129, %s130
      %p141 = scmp.eq.s32.totalorder %s25, 0
      %p142 = por %p140, %p141
      %p143 = scmp.ne.s32.totalorder %s129, %s130
      %p144 = scmp.eq.s32.totalorder %s26, 1
      %p145 = por %p143, %p144
      %p147 = scmp.ne.s32.totalorder %s130, %s146
      %p148 = scmp.eq.s32.totalorder %s26, 0
      %p149 = por %p147, %p148
      %s150 = ssub.s32 %s28, %s35
      %s151 = ssub.s32 %s27, %s39
      %s152 = sor.u32 %s150, %s151
      %p153 = scmp.eq.s32.totalorder %s152, 0
      %s155 = sadd.s32 %s154, 1
      %s156 = scalar_select %p153, %s154, %s155
      %p159 = pneg %p153
      %p160 = scmp.eq.s32.totalorder %s20, 1
      %p161 = por %p159, %p160
      %p162 = scmp.ne.s32.totalorder %s154, %s157
      %p163 = scmp.eq.s32.totalorder %s20, 0
      %p164 = por %p162, %p163
      %p165 = scmp.ne.s32.totalorder %s154, %s157
      %p166 = scmp.eq.s32.totalorder %s25, 1
      %p167 = por %p165, %p166
      %p168 = scmp.ne.s32.totalorder %s157, %s158
      %p169 = scmp.eq.s32.totalorder %s25, 0
      %p170 = por %p168, %p169
      %p171 = scmp.ne.s32.totalorder %s157, %s158
      %p172 = scmp.eq.s32.totalorder %s26, 1
      %p173 = por %p171, %p172
      %p175 = scmp.ne.s32.totalorder %s158, %s174
      %p176 = scmp.eq.s32.totalorder %s26, 0
      %p177 = por %p175, %p176
      %p178 = scmp.le.s32.totalorder 1, %s20
      %p179 = scmp.lt.s32.totalorder %s20, 3
      %p180 = pnand %p178, %p179
      %p181 = pneg %p180
      // Predicated region
      $region9: #{tpu_custom_call.1} parent=5 // pred_check
        _
      $region10: #{tpu_custom_call.1} parent=5 // pred_check_branch
        %183 = sbr.rel (%p180) target = $region12
      $region11: #{tpu_custom_call.1} parent=5 // pred_region
        %s184 = ssub.s32 %s20, 1
        // Predicated region
        $region13: #{tpu_custom_call.1} parent=11 // pred_check
          %p185 = pneg %p58
        $region14: #{tpu_custom_call.1} parent=11 // pred_check_branch
          %187 = sbr.rel (%p185) target = $region16
        $region15: #{tpu_custom_call.1} parent=11 // pred_region
          %189 = vsyncadd [#allocation3], 0
          %s190 = smul.addr %s29, 2
          %s191 = scalar_lea.hbm %s0, %s190
          %s192 = sshll.u32 %s191, 4
          %s193 = int_to_ptr.hbm [resolvable:$true] %s192
          %s194 = sshll.u32 [#allocation2], 4
          %s195 = int_to_ptr.vmem [resolvable:$true] %s194
          %200 = dma.hbm_to_vmem [thread:$0]  %s193, 256, %s195, [#allocation3], 32, 32, 2
        $region16: #{tpu_custom_call.1} parent=11 // pred_fallthru
          _
      $region12: #{tpu_custom_call.1} parent=5 // pred_fallthru
        _
      %p201 = scmp.lt.s32.totalorder %s20, 2
      // Predicated region
      $region17: #{tpu_custom_call.1} parent=5 // pred_check
        %p202 = pneg %p201
      $region18: #{tpu_custom_call.1} parent=5 // pred_check_branch
        %204 = sbr.rel (%p202) target = $region20
      $region19: #{tpu_custom_call.1} parent=5 // pred_region
        // Predicated region
        $region21: #{tpu_custom_call.1} parent=19 // pred_check
          %p205 = pneg %p80
        $region22: #{tpu_custom_call.1} parent=19 // pred_check_branch
          %207 = sbr.rel (%p205) target = $region24
        $region23: #{tpu_custom_call.1} parent=19 // pred_region
          %s208 = sand.u32 %s20, 1
          %s209 = scalar_lea.sflag [#allocation6], %s208
          %s210 = sand.u32 %s70, 1
          %s211 = smul.addr %s210, 8
          %s212 = scalar_lea.vmem [#allocation5], %s211
          %214 = vsyncadd %s209, 0
          %s215 = smul.addr %s28, 8
          %s216 = sadd.s32 %s27, %s215
          %s217 = scalar_lea.hbm %s1, %s216
          %s218 = sshll.u32 %s217, 4
          %s219 = int_to_ptr.hbm [resolvable:$true] %s218
          %s220 = sshll.u32 %s212, 4
          %s221 = int_to_ptr.vmem [resolvable:$true] %s220
          %226 = dma.hbm_to_vmem [thread:$0]  %s219, 128, %s221, %s209, 16, 16, 1
        $region24: #{tpu_custom_call.1} parent=19 // pred_fallthru
          _
        // Predicated region
        $region25: #{tpu_custom_call.1} parent=19 // pred_check
          %p227 = pneg %p108
        $region26: #{tpu_custom_call.1} parent=19 // pred_check_branch
          %229 = sbr.rel (%p227) target = $region28
        $region27: #{tpu_custom_call.1} parent=19 // pred_region
          %s230 = sand.u32 %s20, 1
          %s231 = scalar_lea.sflag [#allocation6], %s230
          %s232 = sand.u32 %s98, 1
          %s233 = smul.addr %s232, 2
          %s234 = scalar_lea.vmem [#allocation7], %s233
          %236 = vsyncadd %s231, 0
          %s237 = sadd.s32 %s27, %s28
          %s238 = smul.addr %s237, 2
          %s239 = scalar_lea.hbm %s2, %s238
          %s241 = sshll.u32 %s239, 4
          %s242 = int_to_ptr.hbm [resolvable:$true] %s241
          %s243 = sshll.u32 %s234, 4
          %s244 = int_to_ptr.vmem [resolvable:$true] %s243
          %246 = dma.hbm_to_vmem [thread:$0]  %s242, 32, %s244, %s231
        $region28: #{tpu_custom_call.1} parent=19 // pred_fallthru
          _
        // Predicated region
        $region29: #{tpu_custom_call.1} parent=19 // pred_check
          %p247 = pneg %p136
        $region30: #{tpu_custom_call.1} parent=19 // pred_check_branch
          %249 = sbr.rel (%p247) target = $region32
        $region31: #{tpu_custom_call.1} parent=19 // pred_region
          %s250 = sand.u32 %s126, 1
          %s251 = scalar_lea.sflag [#allocation9], %s250
          %s252 = sand.u32 %s126, 1
          %s253 = smul.addr %s252, 2
          %s254 = scalar_lea.vmem [#allocation8], %s253
          %256 = vsyncadd %s251, 0
          %s257 = sadd.s32 %s27, %s28
          %s258 = smul.addr %s257, 2
          %s259 = scalar_lea.hbm %s3, %s258
          %s261 = sshll.u32 %s259, 4
          %s262 = int_to_ptr.hbm [resolvable:$true] %s261
          %s263 = sshll.u32 %s254, 4
          %s264 = int_to_ptr.vmem [resolvable:$true] %s263
          %266 = dma.hbm_to_vmem [thread:$0]  %s262, 32, %s264, %s251
        $region32: #{tpu_custom_call.1} parent=19 // pred_fallthru
          _
      $region20: #{tpu_custom_call.1} parent=5 // pred_fallthru
        _
      %p267 = scmp.le.s32.totalorder 1, %s20
      %p268 = scmp.lt.s32.totalorder %s20, 3
      %p269 = pnand %p267, %p268
      %p270 = pneg %p269
      // Predicated region
      $region33: #{tpu_custom_call.1} parent=5 // pred_check
        _
      $region34: #{tpu_custom_call.1} parent=5 // pred_check_branch
        %272 = sbr.rel (%p269) target = $region36
      $region35: #{tpu_custom_call.1} parent=5 // pred_region
        %s273 = ssub.s32 %s20, 1
        // Predicated region
        $region37: #{tpu_custom_call.1} parent=35 // pred_check
          %p274 = pneg %p58
        $region38: #{tpu_custom_call.1} parent=35 // pred_check_branch
          %276 = sbr.rel (%p274) target = $region40
        $region39: #{tpu_custom_call.1} parent=35 // pred_region
          %278 = dma.done [#allocation3], 256
        $region40: #{tpu_custom_call.1} parent=35 // pred_fallthru
          _
        %s279 = sand.u32 %s25, 1
        %s280 = scalar_lea.sflag [#allocation6], %s279
        %s281 = sand.u32 %s73, 1
        %s282 = smul.addr %s281, 8
        %s283 = scalar_lea.vmem [#allocation5], %s282
        // Predicated region
        $region41: #{tpu_custom_call.1} parent=35 // pred_check
          %p284 = pneg %p86
        $region42: #{tpu_custom_call.1} parent=35 // pred_check_branch
          %286 = sbr.rel (%p284) target = $region44
        $region43: #{tpu_custom_call.1} parent=35 // pred_region
          %288 = dma.done %s280, 128
        $region44: #{tpu_custom_call.1} parent=35 // pred_fallthru
          _
        %s289 = sand.u32 %s25, 1
        %s290 = scalar_lea.sflag [#allocation6], %s289
        %s291 = sand.u32 %s101, 1
        %s292 = smul.addr %s291, 2
        %s293 = scalar_lea.vmem [#allocation7], %s292
        // Predicated region
        $region45: #{tpu_custom_call.1} parent=35 // pred_check
          %p294 = pneg %p114
        $region46: #{tpu_custom_call.1} parent=35 // pred_check_branch
          %296 = sbr.rel (%p294) target = $region48
        $region47: #{tpu_custom_call.1} parent=35 // pred_region
          %298 = dma.done %s290, 32
        $region48: #{tpu_custom_call.1} parent=35 // pred_fallthru
          _
        %s299 = sand.u32 %s129, 1
        %s300 = scalar_lea.sflag [#allocation9], %s299
        %s301 = sand.u32 %s129, 1
        %s302 = smul.addr %s301, 2
        %s303 = scalar_lea.vmem [#allocation8], %s302
        // Predicated region
        $region49: #{tpu_custom_call.1} parent=35 // pred_check
          %p304 = pneg %p142
        $region50: #{tpu_custom_call.1} parent=35 // pred_check_branch
          %306 = sbr.rel (%p304) target = $region52
        $region51: #{tpu_custom_call.1} parent=35 // pred_region
          %308 = dma.done %s300, 32
        $region52: #{tpu_custom_call.1} parent=35 // pred_fallthru
          _
        %p309 = pneg %p58
        %p310 = pneg %p55
        %s311 = sand.u32 %s25, 1
        %s312 = scalar_lea.sflag [#allocation6], %s311
        %s313 = sand.u32 %s73, 1
        %s314 = smul.addr %s313, 8
        %s315 = scalar_lea.vmem [#allocation5], %s314
        %p316 = pneg %p86
        %p317 = pneg %p83
        %s318 = sand.u32 %s25, 1
        %s319 = scalar_lea.sflag [#allocation6], %s318
        %s320 = sand.u32 %s101, 1
        %s321 = smul.addr %s320, 2
        %s322 = scalar_lea.vmem [#allocation7], %s321
        %p323 = pneg %p114
        %p324 = pneg %p111
        %s325 = sand.u32 %s129, 1
        %s326 = scalar_lea.sflag [#allocation9], %s325
        %s327 = sand.u32 %s129, 1
        %s328 = smul.addr %s327, 2
        %s329 = scalar_lea.vmem [#allocation8], %s328
        %p330 = pneg %p142
        %p331 = pneg %p139
        %p332 = pneg %p170
        %p333 = pneg %p167
        %s334 = sand.u32 %s157, 1
        %s335 = scalar_lea.sflag [#allocation4], %s334
        %s336 = sand.u32 %s157, 1
        %s337 = smul.addr %s336, 2
        %s338 = scalar_lea.vmem [#allocation10], %s337
        %v339 = vld [vmem:[#allocation2] sm:$0x3]
        %v340 = vld [vmem:[%s283] sm:$0x1]
        %v341 = vunpack.c.l.bf16 %v340
        %v342 = vmul.f32 %v339, %v341
        %s343 = scalar_lea.vmem [#allocation2], 2
        %v344 = vld [vmem:[%s343] sm:$0x3]
        %s345 = scalar_lea.vmem %s283, 1 [#allocation5]
        %v346 = vld [vmem:[%s345] sm:$0x1]
        %v347 = vunpack.c.l.bf16 %v346
        %v348 = vmul.f32 %v344, %v347
        %v349 = vadd.f32 %v342, %v348
        %s350 = scalar_lea.vmem [#allocation2], 4
        %v351 = vld [vmem:[%s350] sm:$0x3]
        %s352 = scalar_lea.vmem %s283, 2 [#allocation5]
        %v353 = vld [vmem:[%s352] sm:$0x1]
        %v354 = vunpack.c.l.bf16 %v353
        %v355 = vmul.f32 %v351, %v354
        %v356 = vadd.f32 %v349, %v355
        %s357 = scalar_lea.vmem [#allocation2], 6
        %v358 = vld [vmem:[%s357] sm:$0x3]
        %s359 = scalar_lea.vmem %s283, 3 [#allocation5]
        %v360 = vld [vmem:[%s359] sm:$0x1]
        %v361 = vunpack.c.l.bf16 %v360
        %v362 = vmul.f32 %v358, %v361
        %v363 = vadd.f32 %v356, %v362
        %s364 = scalar_lea.vmem [#allocation2], 8
        %v365 = vld [vmem:[%s364] sm:$0x3]
        %s366 = scalar_lea.vmem %s283, 4 [#allocation5]
        %v367 = vld [vmem:[%s366] sm:$0x1]
        %v368 = vunpack.c.l.bf16 %v367
        %v369 = vmul.f32 %v365, %v368
        %v370 = vadd.f32 %v363, %v369
        %s371 = scalar_lea.vmem [#allocation2], 10
        %v372 = vld [vmem:[%s371] sm:$0x3]
        %s373 = scalar_lea.vmem %s283, 5 [#allocation5]
        %v374 = vld [vmem:[%s373] sm:$0x1]
        %v375 = vunpack.c.l.bf16 %v374
        %v376 = vmul.f32 %v372, %v375
        %v377 = vadd.f32 %v370, %v376
        %s378 = scalar_lea.vmem [#allocation2], 12
        %v379 = vld [vmem:[%s378] sm:$0x3]
        %s380 = scalar_lea.vmem %s283, 6 [#allocation5]
        %v381 = vld [vmem:[%s380] sm:$0x1]
        %v382 = vunpack.c.l.bf16 %v381
        %v383 = vmul.f32 %v379, %v382
        %v384 = vadd.f32 %v377, %v383
        %s385 = scalar_lea.vmem [#allocation2], 14
        %v386 = vld [vmem:[%s385] sm:$0x3]
        %s387 = scalar_lea.vmem %s283, 7 [#allocation5]
        %v388 = vld [vmem:[%s387] sm:$0x1]
        %v389 = vunpack.c.l.bf16 %v388
        %v390 = vmul.f32 %v386, %v389
        %v391 = vadd.f32 %v384, %v390
        %v392 = vmul.f32 %v391, 0.125
        %v393 = vmax.f32 %v392, 0.0
        %v394 = vrsqrt.pop %v393
        %v395 = vmul.f32 %v394, %v393
        %v396 = vmul.f32 %v395, %v394
        %v397 = vmul.f32 0.5, %v396
        %v398 = vsub.f32 1.5, %v397
        %v399 = vmul.f32 %v394, %v398
        %v400 = vmul.f32 %v393, %v399
        %vm401 = vcmp.eq.f32.partialorder %v393, inf
        %v402 = vsel %vm401, %v393, %v400
        %vm403 = vcmp.eq.f32.partialorder %v393, 0.0
        %v404 = vand.u32 %v393, 2147483648
        %v405 = vsel %vm403, %v404, %v402
        %v406 = vmul.f32 %v405, 0.00495
        %v407 = vld [vmem:[%s293] sm:$0x3]
        %v408 = vmul.f32 %v406, %v407
        %v409 = vld [vmem:[%s303] sm:$0x3]
        %v410 = vmul.f32 %v409, 0.0145
        %v411 = vadd.f32 %v392, %v408
        %v412 = vadd.f32 %v411, %v410
        %v413 = vmax.f32 %v412, 0.0
        %v414 = vmin.f32 %v413, 1.0
        %415 = vst [vmem:[%s338] sm:$0x3] %v414
        %s416 = sand.u32 %s157, 1
        %s417 = scalar_lea.sflag [#allocation4], %s416
        %s418 = sand.u32 %s157, 1
        %s419 = smul.addr %s418, 2
        %s420 = scalar_lea.vmem [#allocation10], %s419
        // Predicated region
        $region53: #{tpu_custom_call.1} parent=35 // pred_check
          %p421 = pneg %p167
        $region54: #{tpu_custom_call.1} parent=35 // pred_check_branch
          %423 = sbr.rel (%p421) target = $region56
        $region55: #{tpu_custom_call.1} parent=35 // pred_region
          %425 = vsyncadd %s417, 0
          %s426 = sadd.s32 %s29, %s30
          %s427 = smul.addr %s426, 2
          %s428 = scalar_lea.hbm %s4, %s427
          %s430 = sshll.u32 %s420, 4
          %s431 = int_to_ptr.vmem [resolvable:$true] %s430
          %s432 = sshll.u32 %s428, 4
          %s433 = int_to_ptr.hbm [resolvable:$true] %s432
          %435 = dma.vmem_to_hbm [thread:$0]  %s431, 32, %s433, %s417
        $region56: #{tpu_custom_call.1} parent=35 // pred_fallthru
          _
      $region36: #{tpu_custom_call.1} parent=5 // pred_fallthru
        _
      %p436 = scmp.le.s32.totalorder 2, %s20
      // Predicated region
      $region57: #{tpu_custom_call.1} parent=5 // pred_check
        %p437 = pneg %p436
      $region58: #{tpu_custom_call.1} parent=5 // pred_check_branch
        %439 = sbr.rel (%p437) target = $region60
      $region59: #{tpu_custom_call.1} parent=5 // pred_region
        %s440 = ssub.s32 %s20, 2
        // Predicated region
        $region61: #{tpu_custom_call.1} parent=59 // pred_check
          %p441 = pneg %p173
        $region62: #{tpu_custom_call.1} parent=59 // pred_check_branch
          %443 = sbr.rel (%p441) target = $region64
        $region63: #{tpu_custom_call.1} parent=59 // pred_region
          %s444 = sand.u32 %s158, 1
          %s445 = scalar_lea.sflag [#allocation4], %s444
          %s446 = sand.u32 %s158, 1
          %s447 = smul.addr %s446, 2
          %s448 = scalar_lea.vmem [#allocation10], %s447
          %450 = dma.done %s445, 32
        $region64: #{tpu_custom_call.1} parent=59 // pred_fallthru
          _
      $region60: #{tpu_custom_call.1} parent=5 // pred_fallthru
        _
    $region6: #{tpu_custom_call.1} parent=1 // loop_footer
      %s24 = sadd.s32 1, %s20
    $region7: #{tpu_custom_call.1} parent=1 // loop_footer_branch
      %19 = sbr.rel target = $region3
    $region8: #{tpu_custom_call.1} parent=1 // loop_exit
      _
    %451 = vsyncpa [#allocation3], 1
    %s452 = scalar_lea.sflag [#allocation3], 1
    %453 = vsyncpa %s452, 1
    %454 = vsyncpa [#allocation6], 1
    %s455 = scalar_lea.sflag [#allocation6], 1
    %456 = vsyncpa %s455, 1
    %457 = vsyncpa [#allocation9], 1
    %s458 = scalar_lea.sflag [#allocation9], 1
    %459 = vsyncpa %s458, 1
    %460 = vsyncpa [#allocation4], 1
    %s461 = scalar_lea.sflag [#allocation4], 1
    %462 = vsyncpa %s461, 1

</llo_original>
